<compile_context>
chip_gen: v5e
topology: v5e:2x2
jax: 0.10.0
libtpu: 0.0.40
codegen_flags: <defaults>
</compile_context>

<pallas_src>
import functools

import jax
import jax.numpy as jnp
from jax.experimental import pallas as pl
from jax.experimental.pallas import tpu as pltpu


def _make_sdpa_kernel(has_mask, return_attn, temperature):
    scale = float(1.0 / float(temperature))

    def kernel(*refs):
        if has_mask:
            q_ref, k_ref, v_ref, mask_ref = refs[0], refs[1], refs[2], refs[3]
            rest = refs[4:]
        else:
            q_ref, k_ref, v_ref = refs[0], refs[1], refs[2]
            mask_ref = None
            rest = refs[3:]
        out_ref = rest[0]
        attn_ref = rest[1] if return_attn else None

        q = q_ref[...]          # (Hb, Lq_blk, Dk)  native dtype
        k = k_ref[...]          # (Hb, Lk, Dk)      native dtype

        # Batched QK^T contracting Dk directly (no in-kernel transpose),
        # f32 accumulation on the MXU.
        s = jax.lax.dot_general(
            q, k,
            dimension_numbers=(((2,), (2,)), ((0,), (0,))),
            preferred_element_type=jnp.float32,
        )                        # (Hb, Lq_blk, Lk) f32
        s = s * jnp.float32(scale)

        if has_mask:
            s = jnp.where(mask_ref[...] == 0, jnp.float32(-1e9), s)

        # Numerically-stable softmax over the last axis.
        m = jnp.max(s, axis=-1, keepdims=True)
        e = jnp.exp(s - m)
        denom = jnp.sum(e, axis=-1, keepdims=True)
        p = e * pl.reciprocal(denom, approx=True)   # EUP slot, VALU stays free

        if return_attn:
            attn_ref[...] = p.astype(attn_ref.dtype)

        # out = attn @ v, feed the MXU in v's dtype, accumulate in f32.
        pv = jax.lax.dot_general(
            p.astype(v_ref.dtype), v_ref[...],
            dimension_numbers=(((2,), (1,)), ((0,), (0,))),
            preferred_element_type=jnp.float32,
        )                        # (Hb, Lq_blk, Dv) f32
        out_ref[...] = pv.astype(out_ref.dtype)

    return kernel


def _pick_q_block(Lq, target=256):
    """Largest multiple of 8 that divides Lq and is <= target; else full Lq."""
    if Lq <= target:
        return Lq
    for cand in range(target, 7, -8):
        if Lq % cand == 0:
            return cand
    return Lq


def scaled_dot_product_attention(q, k, v, temperature, mask=None, *,
                                 return_attn=True):
    """q: (B,H,Lq,Dk), k: (B,H,Lk,Dk), v: (B,H,Lk,Dv), mask broadcastable to
    (B,H,Lq,Lk) or None.  Returns (out, attn) — attn is None if
    return_attn=False (fast path with no O(L^2) writeback)."""
    B, H, Lq, Dk = q.shape
    Lk = k.shape[2]
    Dv = v.shape[3]
    BH = B * H

    q3 = q.reshape(BH, Lq, Dk)
    k3 = k.reshape(BH, Lk, Dk)
    v3 = v.reshape(BH, Lk, Dv)

    has_mask = mask is not None
    if has_mask:
        mask3 = (jnp.broadcast_to(mask, (B, H, Lq, Lk))
                 .reshape(BH, Lq, Lk).astype(jnp.int32))

    # ---- tile selection -------------------------------------------------
    lq_blk = _pick_q_block(Lq)

    itemsize = jnp.dtype(q.dtype).itemsize
    per_head_bytes = (
        (lq_blk * Dk + Lk * Dk + Lk * Dv + lq_blk * Dv) * itemsize  # q,k,v,out
        + lq_blk * Lk * 4                                           # f32 scores
    )
    if has_mask:
        per_head_bytes += lq_blk * Lk * 4
    if return_attn:
        per_head_bytes += lq_blk * Lk * itemsize
    budget = 4 * 1024 * 1024          # conservative: fits v5e's 16 MiB scoped
    hb = max(1, min(BH, budget // max(per_head_bytes, 1)))
    while BH % hb != 0:               # heads-per-block must divide B*H
        hb -= 1

    grid = (BH // hb, Lq // lq_blk)

    # ---- specs -----------------------------------------------------------
    in_specs = [
        pl.BlockSpec((hb, lq_blk, Dk), lambda g, i: (g, i, 0)),
        pl.BlockSpec((hb, Lk, Dk), lambda g, i: (g, 0, 0)),
        pl.BlockSpec((hb, Lk, Dv), lambda g, i: (g, 0, 0)),
    ]
    inputs = [q3, k3, v3]
    if has_mask:
        in_specs.append(pl.BlockSpec((hb, lq_blk, Lk), lambda g, i: (g, i, 0)))
        inputs.append(mask3)

    out_shapes = [jax.ShapeDtypeStruct((BH, Lq, Dv), q.dtype)]
    out_specs = [pl.BlockSpec((hb, lq_blk, Dv), lambda g, i: (g, i, 0))]
    if return_attn:
        out_shapes.append(jax.ShapeDtypeStruct((BH, Lq, Lk), q.dtype))
        out_specs.append(pl.BlockSpec((hb, lq_blk, Lk), lambda g, i: (g, i, 0)))

    kernel = _make_sdpa_kernel(has_mask, return_attn, temperature)

    results = pl.pallas_call(
        kernel,
        out_shape=tuple(out_shapes),
        grid_spec=pltpu.PrefetchScalarGridSpec(
            num_scalar_prefetch=0,
            grid=grid,
            in_specs=in_specs,
            out_specs=tuple(out_specs),
        ),
        compiler_params=pltpu.CompilerParams(
            dimension_semantics=("parallel", "parallel")
        ),
    )(*inputs)

    out = results[0].reshape(B, H, Lq, Dv)
    if return_attn:
        attn = results[1].reshape(B, H, Lq, Lk)
        return out, attn
    return out, None


def _reference(q, k, v, temperature, mask=None):
    attn = jnp.einsum("bhqd,bhkd->bhqk", q / temperature, k)
    if mask is not None:
        attn = jnp.where(mask == 0, -1e9, attn)
    attn = jax.nn.softmax(attn, axis=-1)
    out = jnp.einsum("bhqk,bhkd->bhqd", attn, v)
    return out, attn


if __name__ == "__main__":
    key = jax.random.PRNGKey(0)
    kq, kk, kv = jax.random.split(key, 3)

    B, H, Lq, Lk, Dk, Dv = 2, 2, 8, 8, 32, 32
    temperature = float(Dk) ** 0.5

    q = jax.random.normal(kq, (B, H, Lq, Dk), dtype=jnp.float32)
    k = jax.random.normal(kk, (B, H, Lk, Dk), dtype=jnp.float32)
    v = jax.random.normal(kv, (B, H, Lk, Dv), dtype=jnp.float32)

    # tolerances account for pl.reciprocal(approx=True) (~2^-12 relative)
    ATOL, RTOL = 2e-3, 2e-3

    # --- unmasked path (no mask input, no jnp.where in-kernel) -------------
    out, attn = scaled_dot_product_attention(q, k, v, temperature, mask=None)
    out = jax.block_until_ready(out)
    attn = jax.block_until_ready(attn)
    ref_out, ref_attn = _reference(q, k, v, temperature, mask=None)
    assert jnp.allclose(out, ref_out, atol=ATOL, rtol=RTOL), "unmasked out mismatch"
    assert jnp.allclose(attn, ref_attn, atol=ATOL, rtol=RTOL), "unmasked attn mismatch"

    # --- masked path (causal mask, broadcast over B and H) ------------------
    mask = jnp.tril(jnp.ones((Lq, Lk), dtype=jnp.int32))[None, None]
    out_m, attn_m = scaled_dot_product_attention(q, k, v, temperature, mask=mask)
    out_m = jax.block_until_ready(out_m)
    attn_m = jax.block_until_ready(attn_m)
    ref_out_m, ref_attn_m = _reference(q, k, v, temperature, mask=mask)
    assert jnp.allclose(out_m, ref_out_m, atol=ATOL, rtol=RTOL), "masked out mismatch"
    assert jnp.allclose(attn_m, ref_attn_m, atol=ATOL, rtol=RTOL), "masked attn mismatch"

    # --- fast path: no attn writeback ---------------------------------------
    out_f, attn_f = scaled_dot_product_attention(q, k, v, temperature, mask=mask,
                                                 return_attn=False)
    out_f = jax.block_until_ready(out_f)
    assert attn_f is None
    assert jnp.allclose(out_f, ref_out_m, atol=ATOL, rtol=RTOL), "fast-path out mismatch"

    print("KERNEL_OK")
</pallas_src>

<mosaic_0001>
module attributes {stable_mosaic.version = 11 : i64} {
  func.func @kernel(%arg0: i32, %arg1: i32, %arg2: memref<4x8x32xf32, #tpu.memory_space<vmem>>, %arg3: memref<4x8x32xf32, #tpu.memory_space<vmem>>, %arg4: memref<4x8x32xf32, #tpu.memory_space<vmem>>, %arg5: memref<4x8x32xf32, #tpu.memory_space<vmem>>, %arg6: memref<4x8x8xf32, #tpu.memory_space<vmem>>) attributes {dimension_semantics = [#tpu.dimension_semantics<parallel>, #tpu.dimension_semantics<parallel>], iteration_bounds = array<i64: 1, 1>, scalar_prefetch = 0 : i64, scratch_operands = 0 : i64, tpu.core_type = #tpu.core_type<tc>, window_params = [{transform_indices = @transform_0, window_bounds = array<i64: 4, 8, 32>}, {transform_indices = @transform_1, window_bounds = array<i64: 4, 8, 32>}, {transform_indices = @transform_2, window_bounds = array<i64: 4, 8, 32>}, {transform_indices = @transform_3, window_bounds = array<i64: 4, 8, 32>}, {transform_indices = @transform_4, window_bounds = array<i64: 4, 8, 8>}]} {
    %c0 = arith.constant 0 : index
    %c0_0 = arith.constant 0 : index
    %c0_1 = arith.constant 0 : index
    %0 = vector.load %arg2[%c0, %c0_0, %c0_1] : memref<4x8x32xf32, #tpu.memory_space<vmem>>, vector<4x8x32xf32>
    %c0_2 = arith.constant 0 : index
    %c0_3 = arith.constant 0 : index
    %c0_4 = arith.constant 0 : index
    %1 = vector.load %arg3[%c0_2, %c0_3, %c0_4] : memref<4x8x32xf32, #tpu.memory_space<vmem>>, vector<4x8x32xf32>
    %cst = arith.constant dense<0.000000e+00> : vector<4x8x8xf32>
    %2 = tpu.matmul %0, %1, %cst {dimension_numbers = #tpu.dot_dimension_numbers<[2], [2], [1], [1], [0, 0, 0, 1, 1, 1], [0], [0]>} : vector<4x8x32xf32>, vector<4x8x32xf32>, vector<4x8x8xf32> -> vector<4x8x8xf32>
    %cst_5 = arith.constant 0.176776692 : f32
    %3 = vector.broadcast %cst_5 : f32 to vector<4x8x8xf32>
    %4 = arith.mulf %2, %3 : vector<4x8x8xf32>
    %cst_6 = arith.constant dense<0xFF800000> : vector<4x8xf32>
    %5 = vector.multi_reduction <maximumf>, %4, %cst_6 [2] : vector<4x8x8xf32> to vector<4x8xf32>
    %6 = vector.shape_cast %5 : vector<4x8xf32> to vector<4x8x1xf32>
    %7 = vector.broadcast %6 : vector<4x8x1xf32> to vector<4x8x8xf32>
    %8 = arith.subf %4, %7 : vector<4x8x8xf32>
    %9 = math.exp %8 : vector<4x8x8xf32>
    %cst_7 = arith.constant dense<0.000000e+00> : vector<4x8xf32>
    %10 = vector.multi_reduction <add>, %9, %cst_7 [2] : vector<4x8x8xf32> to vector<4x8xf32>
    %11 = vector.shape_cast %10 : vector<4x8xf32> to vector<4x8x1xf32>
    %12 = tpu.reciprocal %11 {approx = true} : vector<4x8x1xf32> -> vector<4x8x1xf32>
    %13 = vector.broadcast %12 : vector<4x8x1xf32> to vector<4x8x8xf32>
    %14 = arith.mulf %9, %13 : vector<4x8x8xf32>
    %c0_8 = arith.constant 0 : index
    %c0_9 = arith.constant 0 : index
    %c0_10 = arith.constant 0 : index
    %15 = vector.load %arg6[%c0_8, %c0_9, %c0_10] : memref<4x8x8xf32, #tpu.memory_space<vmem>>, vector<4x8x8xf32>
    tpu.vector_store %arg6[%c0_8, %c0_9, %c0_10], %14 {strides = array<i32>} : memref<4x8x8xf32, #tpu.memory_space<vmem>>, vector<4x8x8xf32>,
    %c0_11 = arith.constant 0 : index
    %c0_12 = arith.constant 0 : index
    %c0_13 = arith.constant 0 : index
    %16 = vector.load %arg4[%c0_11, %c0_12, %c0_13] : memref<4x8x32xf32, #tpu.memory_space<vmem>>, vector<4x8x32xf32>
    %cst_14 = arith.constant dense<0.000000e+00> : vector<4x8x32xf32>
    %17 = tpu.matmul %14, %16, %cst_14 {dimension_numbers = #tpu.dot_dimension_numbers<[2], [1], [1], [2], [0, 0, 0, 1, 1, 2], [0], [0]>} : vector<4x8x8xf32>, vector<4x8x32xf32>, vector<4x8x32xf32> -> vector<4x8x32xf32>
    %c0_15 = arith.constant 0 : index
    %c0_16 = arith.constant 0 : index
    %c0_17 = arith.constant 0 : index
    %18 = vector.load %arg5[%c0_15, %c0_16, %c0_17] : memref<4x8x32xf32, #tpu.memory_space<vmem>>, vector<4x8x32xf32>
    tpu.vector_store %arg5[%c0_15, %c0_16, %c0_17], %17 {strides = array<i32>} : memref<4x8x32xf32, #tpu.memory_space<vmem>>, vector<4x8x32xf32>,
    return
  }
  func.func @transform_0(%arg0: i32, %arg1: i32) -> (i32, i32, i32) {
    %c0_i32 = arith.constant 0 : i32
    %c0_i32_0 = arith.constant 0 : i32
    return %arg0, %arg1, %c0_i32 : i32, i32, i32
  }
  func.func @transform_1(%arg0: i32, %arg1: i32) -> (i32, i32, i32) {
    %c0_i32 = arith.constant 0 : i32
    %c0_i32_0 = arith.constant 0 : i32
    %c0_i32_1 = arith.constant 0 : i32
    return %arg0, %c0_i32, %c0_i32_0 : i32, i32, i32
  }
  func.func @transform_2(%arg0: i32, %arg1: i32) -> (i32, i32, i32) {
    %c0_i32 = arith.constant 0 : i32
    %c0_i32_0 = arith.constant 0 : i32
    %c0_i32_1 = arith.constant 0 : i32
    return %arg0, %c0_i32, %c0_i32_0 : i32, i32, i32
  }
  func.func @transform_3(%arg0: i32, %arg1: i32) -> (i32, i32, i32) {
    %c0_i32 = arith.constant 0 : i32
    %c0_i32_0 = arith.constant 0 : i32
    return %arg0, %arg1, %c0_i32 : i32, i32, i32
  }
  func.func @transform_4(%arg0: i32, %arg1: i32) -> (i32, i32, i32) {
    %c0_i32 = arith.constant 0 : i32
    %c0_i32_0 = arith.constant 0 : i32
    return %arg0, %arg1, %c0_i32 : i32, i32, i32
  }
}

</mosaic_0001>

<llo_original>
// kernel: tpu_custom_call.1
$region0: #{tpu_custom_call.1}
  #allocation0 [shape = 'u32[]', space=smem, size = 0x4, offset = 0x4, fixed_abs, tag = 'smem constant byte address 0x4 - core index']
  #allocation1 [shape = 'u32[72,128]{1,0:T(1,128)}', space=vmem, size = 0x9000, scoped, tag = 'internal scratch']
  %s0 = inlined_call_operand.hbm [shape: f32[4,8,32], index: 0, kind: input, shape index: {}]
  %s1 = inlined_call_operand.hbm [shape: f32[4,8,32], index: 1, kind: input, shape index: {}]
  %s2 = inlined_call_operand.hbm [shape: f32[4,8,32], index: 2, kind: input, shape index: {}]
  %s3 = inlined_call_operand.hbm [shape: f32[4,8,32], index: 3, kind: output, shape index: {0}]
  %s4 = inlined_call_operand.hbm [shape: f32[4,8,8], index: 4, kind: output, shape index: {1}]
  %5 = xla_tuple %s3, %s4
  %s6 = sld [smem:[#allocation0]]
  $region42: #{tpu_custom_call.1} parent=0
    _
  %s8 = ssub.s32 1, %s6
  %s9 = scalar_select 0, %s8, %s6
  $region1: #{tpu_custom_call.1} parent=0
    #allocation2 [shape = 'u8[16384]{0}', space=vmem, size = 0x4000, scoped, tag = 'input window, operand 0, single buffered']
    #allocation3 [shape = 's32[1]{0}', space=sflag, size = 0x4, scoped, tag = 'scoped memory for tpu_custom_call.1']
    #allocation4 [shape = 's32[1]{0}', space=sflag, size = 0x4, scoped, tag = 'scoped memory for tpu_custom_call.1']
    #allocation5 [shape = 'u8[16384]{0}', space=vmem, size = 0x4000, scoped, tag = 'input window, operand 1, single buffered']
    #allocation6 [shape = 's32[1]{0}', space=sflag, size = 0x4, scoped, tag = 'scoped memory for tpu_custom_call.1']
    #allocation7 [shape = 'u8[16384]{0}', space=vmem, size = 0x4000, scoped, tag = 'input window, operand 2, single buffered']
    #allocation8 [shape = 'u8[16384]{0}', space=vmem, size = 0x4000, scoped, tag = 'output window, operand 0, single buffered']
    #allocation9 [shape = 'u8[16384]{0}', space=vmem, size = 0x4000, scoped, tag = 'output window, operand 1, single buffered']
    #allocation10 [shape = 's32[1]{0}', space=sflag, size = 0x4, scoped, tag = 'scoped memory for tpu_custom_call.1']
    %10 = vsyncpa [#allocation3], 0
    %11 = vsyncpa [#allocation6], 0
    %12 = vsyncpa [#allocation4], 0
    %13 = vsyncpa [#allocation10], 0
    // Predicated region
    $region2: #{tpu_custom_call.1} parent=1 // pred_check
      _
    $region3: #{tpu_custom_call.1} parent=1 // pred_check_branch
      %15 = sbr.rel (0) target = $region5
    $region4: #{tpu_custom_call.1} parent=1 // pred_region
      %17 = vsyncadd [#allocation3], 0
      %s18 = sshll.u32 %s0, 4
      %s19 = int_to_ptr.hbm [resolvable:$true] %s18
      %s20 = sshll.u32 [#allocation2], 4
      %s21 = int_to_ptr.vmem [resolvable:$true] %s20
      %26 = dma.hbm_to_vmem [thread:$0]  %s19, 512, %s21, [#allocation3], 128, 128, 8
    $region5: #{tpu_custom_call.1} parent=1 // pred_fallthru
      _
    // Predicated region
    $region6: #{tpu_custom_call.1} parent=1 // pred_check
      _
    $region7: #{tpu_custom_call.1} parent=1 // pred_check_branch
      %28 = sbr.rel (0) target = $region9
    $region8: #{tpu_custom_call.1} parent=1 // pred_region
      %30 = vsyncadd [#allocation6], 0
      %s31 = sshll.u32 %s1, 4
      %s32 = int_to_ptr.hbm [resolvable:$true] %s31
      %s33 = sshll.u32 [#allocation5], 4
      %s34 = int_to_ptr.vmem [resolvable:$true] %s33
      %39 = dma.hbm_to_vmem [thread:$0]  %s32, 512, %s34, [#allocation6], 128, 128, 8
    $region9: #{tpu_custom_call.1} parent=1 // pred_fallthru
      _
    // Predicated region
    $region10: #{tpu_custom_call.1} parent=1 // pred_check
      _
    $region11: #{tpu_custom_call.1} parent=1 // pred_check_branch
      %41 = sbr.rel (0) target = $region13
    $region12: #{tpu_custom_call.1} parent=1 // pred_region
      %43 = vsyncadd [#allocation6], 0
      %s44 = sshll.u32 %s2, 4
      %s45 = int_to_ptr.hbm [resolvable:$true] %s44
      %s46 = sshll.u32 [#allocation7], 4
      %s47 = int_to_ptr.vmem [resolvable:$true] %s46
      %52 = dma.hbm_to_vmem [thread:$0]  %s45, 512, %s47, [#allocation6], 128, 128, 8
    $region13: #{tpu_custom_call.1} parent=1 // pred_fallthru
      _
    // Predicated region
    $region14: #{tpu_custom_call.1} parent=1 // pred_check
      _
    $region15: #{tpu_custom_call.1} parent=1 // pred_check_branch
      %54 = sbr.rel (0) target = $region17
    $region16: #{tpu_custom_call.1} parent=1 // pred_region
      %56 = dma.done [#allocation3], 512
    $region17: #{tpu_custom_call.1} parent=1 // pred_fallthru
      _
    // Predicated region
    $region18: #{tpu_custom_call.1} parent=1 // pred_check
      _
    $region19: #{tpu_custom_call.1} parent=1 // pred_check_branch
      %58 = sbr.rel (0) target = $region21
    $region20: #{tpu_custom_call.1} parent=1 // pred_region
      %60 = dma.done [#allocation6], 512
    $region21: #{tpu_custom_call.1} parent=1 // pred_fallthru
      _
    // Predicated region
    $region22: #{tpu_custom_call.1} parent=1 // pred_check
      _
    $region23: #{tpu_custom_call.1} parent=1 // pred_check_branch
      %62 = sbr.rel (0) target = $region25
    $region24: #{tpu_custom_call.1} parent=1 // pred_region
      %64 = dma.done [#allocation6], 512
    $region25: #{tpu_custom_call.1} parent=1 // pred_fallthru
      _
    %v65 = vld [vmem:[#allocation2] sm:$0xff]
    %v66 = vld [vmem:[#allocation2 + $0x8] sm:$0xff]
    %v67 = vld [vmem:[#allocation2 + $0x10] sm:$0xff]
    %v68 = vld [vmem:[#allocation2 + $0x18] sm:$0xff]
    %v69 = vld [vmem:[#allocation5] sm:$0xff]
    %v70 = vld [vmem:[#allocation5 + $0x8] sm:$0xff]
    %v71 = vld [vmem:[#allocation5 + $0x10] sm:$0xff]
    %v72 = vld [vmem:[#allocation5 + $0x18] sm:$0xff]
    %vm73 = vcmask 261120
    %v75 = vsel %vm73, %v65, 0
    %v78 = vsel %vm73, %v69, 0
    %80 = vmatpush.xpose.msra.mxu0 0.0
    %81 = vmatpush.xpose.msra.mxu0 0.0
    %82 = vmatpush.xpose.msra.mxu0 0.0
    %83 = vmatpush.xpose.msra.mxu0 0.0
    %84 = vmatpush.xpose.msra.mxu0 0.0
    %85 = vmatpush.xpose.msra.mxu0 0.0
    %86 = vmatpush.xpose.msra.mxu0 0.0
    %87 = vmatpush.xpose.msra.mxu0 0.0
    %88 = vmatpush.xpose.msra.mxu0 0.0
    %89 = vmatpush.xpose.msra.mxu0 0.0
    %90 = vmatpush.xpose.msra.mxu0 0.0
    %91 = vmatpush.xpose.msra.mxu0 0.0
    %92 = vmatpush.xpose.msra.mxu0 0.0
    %93 = vmatpush.xpose.msra.mxu0 0.0
    %94 = vmatpush.xpose.msra.mxu0 0.0
    %95 = vmatpush.xpose.msra.mxu0 %v78
    %96 = vmatmul.f32.gmra.mxu0 %v75
    %v97 = vpop.f32.mrf.mxu0
    %v98 = vadd.f32 0.0, %v97
    %99 = vdwg.mxu0
    %v101 = vsel %vm73, %v66, 0
    %v104 = vsel %vm73, %v70, 0
    %106 = vmatpush.xpose.msra.mxu0 0.0
    %107 = vmatpush.xpose.msra.mxu0 0.0
    %108 = vmatpush.xpose.msra.mxu0 0.0
    %109 = vmatpush.xpose.msra.mxu0 0.0
    %110 = vmatpush.xpose.msra.mxu0 0.0
    %111 = vmatpush.xpose.msra.mxu0 0.0
    %112 = vmatpush.xpose.msra.mxu0 0.0
    %113 = vmatpush.xpose.msra.mxu0 0.0
    %114 = vmatpush.xpose.msra.mxu0 0.0
    %115 = vmatpush.xpose.msra.mxu0 0.0
    %116 = vmatpush.xpose.msra.mxu0 0.0
    %117 = vmatpush.xpose.msra.mxu0 0.0
    %118 = vmatpush.xpose.msra.mxu0 0.0
    %119 = vmatpush.xpose.msra.mxu0 0.0
    %120 = vmatpush.xpose.msra.mxu0 0.0
    %121 = vmatpush.xpose.msra.mxu0 %v104
    %122 = vmatmul.f32.gmra.mxu0 %v101
    %v123 = vpop.f32.mrf.mxu0
    %v124 = vadd.f32 0.0, %v123
    %125 = vdwg.mxu0
    %v127 = vsel %vm73, %v67, 0
    %v130 = vsel %vm73, %v71, 0
    %132 = vmatpush.xpose.msra.mxu0 0.0
    %133 = vmatpush.xpose.msra.mxu0 0.0
    %134 = vmatpush.xpose.msra.mxu0 0.0
    %135 = vmatpush.xpose.msra.mxu0 0.0
    %136 = vmatpush.xpose.msra.mxu0 0.0
    %137 = vmatpush.xpose.msra.mxu0 0.0
    %138 = vmatpush.xpose.msra.mxu0 0.0
    %139 = vmatpush.xpose.msra.mxu0 0.0
    %140 = vmatpush.xpose.msra.mxu0 0.0
    %141 = vmatpush.xpose.msra.mxu0 0.0
    %142 = vmatpush.xpose.msra.mxu0 0.0
    %143 = vmatpush.xpose.msra.mxu0 0.0
    %144 = vmatpush.xpose.msra.mxu0 0.0
    %145 = vmatpush.xpose.msra.mxu0 0.0
    %146 = vmatpush.xpose.msra.mxu0 0.0
    %147 = vmatpush.xpose.msra.mxu0 %v130
    %148 = vmatmul.f32.gmra.mxu0 %v127
    %v149 = vpop.f32.mrf.mxu0
    %v150 = vadd.f32 0.0, %v149
    %151 = vdwg.mxu0
    %v153 = vsel %vm73, %v68, 0
    %v156 = vsel %vm73, %v72, 0
    %158 = vmatpush.xpose.msra.mxu0 0.0
    %159 = vmatpush.xpose.msra.mxu0 0.0
    %160 = vmatpush.xpose.msra.mxu0 0.0
    %161 = vmatpush.xpose.msra.mxu0 0.0
    %162 = vmatpush.xpose.msra.mxu0 0.0
    %163 = vmatpush.xpose.msra.mxu0 0.0
    %164 = vmatpush.xpose.msra.mxu0 0.0
    %165 = vmatpush.xpose.msra.mxu0 0.0
    %166 = vmatpush.xpose.msra.mxu0 0.0
    %167 = vmatpush.xpose.msra.mxu0 0.0
    %168 = vmatpush.xpose.msra.mxu0 0.0
    %169 = vmatpush.xpose.msra.mxu0 0.0
    %170 = vmatpush.xpose.msra.mxu0 0.0
    %171 = vmatpush.xpose.msra.mxu0 0.0
    %172 = vmatpush.xpose.msra.mxu0 0.0
    %173 = vmatpush.xpose.msra.mxu0 %v156
    %174 = vmatmul.f32.gmra.mxu0 %v153
    %v175 = vpop.f32.mrf.mxu0
    %v176 = vadd.f32 0.0, %v175
    %177 = vdwg.mxu0
    %v178 = vmul.f32 %v98, 0.17677669
    %v179 = vmul.f32 %v124, 0.17677669
    %v180 = vmul.f32 %v150, 0.17677669
    %v181 = vmul.f32 %v176, 0.17677669
    %vm182 = vcmask 64512
    %v183 = vsel %vm182, %v178, -inf
    %184 = vmax.xlane.f32.xlu0 %v183
    %v185 = vpop.xlane.xlu0 %184
    %v186 = vsel %vm182, %v179, -inf
    %187 = vmax.xlane.f32.xlu0 %v186
    %v188 = vpop.xlane.xlu0 %187
    %v189 = vsel %vm182, %v180, -inf
    %190 = vmax.xlane.f32.xlu0 %v189
    %v191 = vpop.xlane.xlu0 %190
    %v192 = vsel %vm182, %v181, -inf
    %193 = vmax.xlane.f32.xlu0 %v192
    %v194 = vpop.xlane.xlu0 %193
    %v195 = vsub.f32 %v178, %v185
    %v196 = vsub.f32 %v179, %v188
    %v197 = vsub.f32 %v180, %v191
    %v198 = vsub.f32 %v181, %v194
    %v199 = vmul.f32 %v195, 1.442695
    %v200 = vpow.pop %v199
    %v201 = vmul.f32 %v196, 1.442695
    %v202 = vpow.pop %v201
    %v203 = vmul.f32 %v197, 1.442695
    %v204 = vpow.pop %v203
    %v205 = vmul.f32 %v198, 1.442695
    %v206 = vpow.pop %v205
    %v207 = vsel %vm182, %v200, 0.0
    %208 = vadd.xlane.f32.xlu0 %v207
    %v209 = vpop.xlane.xlu0 %208
    %v210 = vsel %vm182, %v202, 0.0
    %211 = vadd.xlane.f32.xlu0 %v210
    %v212 = vpop.xlane.xlu0 %211
    %v213 = vsel %vm182, %v204, 0.0
    %214 = vadd.xlane.f32.xlu0 %v213
    %v215 = vpop.xlane.xlu0 %214
    %v216 = vsel %vm182, %v206, 0.0
    %217 = vadd.xlane.f32.xlu0 %v216
    %v218 = vpop.xlane.xlu0 %217
    %v219 = vrcp.pop %v209
    %v220 = vrcp.pop %v212
    %v221 = vrcp.pop %v215
    %v222 = vrcp.pop %v218
    %v223 = vmul.f32 %v200, %v219
    %v224 = vmul.f32 %v202, %v220
    %v225 = vmul.f32 %v204, %v221
    %v226 = vmul.f32 %v206, %v222
    %227 = vst.msk [vmem:[#allocation9] sm:$0xff] %vm182, %v223
    %228 = vst.msk [vmem:[#allocation9 + $0x8] sm:$0xff] %vm182, %v224
    %229 = vst.msk [vmem:[#allocation9 + $0x10] sm:$0xff] %vm182, %v225
    %230 = vst.msk [vmem:[#allocation9 + $0x18] sm:$0xff] %vm182, %v226
    %v231 = vld [vmem:[#allocation7] sm:$0xff]
    %v232 = vld [vmem:[#allocation7 + $0x8] sm:$0xff]
    %v233 = vld [vmem:[#allocation7 + $0x10] sm:$0xff]
    %v234 = vld [vmem:[#allocation7 + $0x18] sm:$0xff]
    %v236 = vsel %vm182, %v223, 0
    %238 = vmatpush.msra.mxu0 0.0
    %239 = vmatpush.msra.mxu0 0.0
    %240 = vmatpush.msra.mxu0 0.0
    %241 = vmatpush.msra.mxu0 0.0
    %242 = vmatpush.msra.mxu0 0.0
    %243 = vmatpush.msra.mxu0 0.0
    %244 = vmatpush.msra.mxu0 0.0
    %245 = vmatpush.msra.mxu0 0.0
    %246 = vmatpush.msra.mxu0 0.0
    %247 = vmatpush.msra.mxu0 0.0
    %248 = vmatpush.msra.mxu0 0.0
    %249 = vmatpush.msra.mxu0 0.0
    %250 = vmatpush.msra.mxu0 0.0
    %251 = vmatpush.msra.mxu0 0.0
    %252 = vmatpush.msra.mxu0 0.0
    %253 = vmatpush.msra.mxu0 %v231
    %254 = vmatmul.f32.gmra.mxu0 %v236
    %v255 = vpop.f32.mrf.mxu0
    %v256 = vadd.f32 0.0, %v255
    %257 = vdwg.mxu0
    %v259 = vsel %vm182, %v224, 0
    %261 = vmatpush.msra.mxu0 0.0
    %262 = vmatpush.msra.mxu0 0.0
    %263 = vmatpush.msra.mxu0 0.0
    %264 = vmatpush.msra.mxu0 0.0
    %265 = vmatpush.msra.mxu0 0.0
    %266 = vmatpush.msra.mxu0 0.0
    %267 = vmatpush.msra.mxu0 0.0
    %268 = vmatpush.msra.mxu0 0.0
    %269 = vmatpush.msra.mxu0 0.0
    %270 = vmatpush.msra.mxu0 0.0
    %271 = vmatpush.msra.mxu0 0.0
    %272 = vmatpush.msra.mxu0 0.0
    %273 = vmatpush.msra.mxu0 0.0
    %274 = vmatpush.msra.mxu0 0.0
    %275 = vmatpush.msra.mxu0 0.0
    %276 = vmatpush.msra.mxu0 %v232
    %277 = vmatmul.f32.gmra.mxu0 %v259
    %v278 = vpop.f32.mrf.mxu0
    %v279 = vadd.f32 0.0, %v278
    %280 = vdwg.mxu0
    %v282 = vsel %vm182, %v225, 0
    %284 = vmatpush.msra.mxu0 0.0
    %285 = vmatpush.msra.mxu0 0.0
    %286 = vmatpush.msra.mxu0 0.0
    %287 = vmatpush.msra.mxu0 0.0
    %288 = vmatpush.msra.mxu0 0.0
    %289 = vmatpush.msra.mxu0 0.0
    %290 = vmatpush.msra.mxu0 0.0
    %291 = vmatpush.msra.mxu0 0.0
    %292 = vmatpush.msra.mxu0 0.0
    %293 = vmatpush.msra.mxu0 0.0
    %294 = vmatpush.msra.mxu0 0.0
    %295 = vmatpush.msra.mxu0 0.0
    %296 = vmatpush.msra.mxu0 0.0
    %297 = vmatpush.msra.mxu0 0.0
    %298 = vmatpush.msra.mxu0 0.0
    %299 = vmatpush.msra.mxu0 %v233
    %300 = vmatmul.f32.gmra.mxu0 %v282
    %v301 = vpop.f32.mrf.mxu0
    %v302 = vadd.f32 0.0, %v301
    %303 = vdwg.mxu0
    %v305 = vsel %vm182, %v226, 0
    %307 = vmatpush.msra.mxu0 0.0
    %308 = vmatpush.msra.mxu0 0.0
    %309 = vmatpush.msra.mxu0 0.0
    %310 = vmatpush.msra.mxu0 0.0
    %311 = vmatpush.msra.mxu0 0.0
    %312 = vmatpush.msra.mxu0 0.0
    %313 = vmatpush.msra.mxu0 0.0
    %314 = vmatpush.msra.mxu0 0.0
    %315 = vmatpush.msra.mxu0 0.0
    %316 = vmatpush.msra.mxu0 0.0
    %317 = vmatpush.msra.mxu0 0.0
    %318 = vmatpush.msra.mxu0 0.0
    %319 = vmatpush.msra.mxu0 0.0
    %320 = vmatpush.msra.mxu0 0.0
    %321 = vmatpush.msra.mxu0 0.0
    %322 = vmatpush.msra.mxu0 %v234
    %323 = vmatmul.f32.gmra.mxu0 %v305
    %v324 = vpop.f32.mrf.mxu0
    %v325 = vadd.f32 0.0, %v324
    %326 = vdwg.mxu0
    %327 = vst.msk [vmem:[#allocation8] sm:$0xff] %vm73, %v256
    %328 = vst.msk [vmem:[#allocation8 + $0x8] sm:$0xff] %vm73, %v279
    %329 = vst.msk [vmem:[#allocation8 + $0x10] sm:$0xff] %vm73, %v302
    %330 = vst.msk [vmem:[#allocation8 + $0x18] sm:$0xff] %vm73, %v325
    // Predicated region
    $region26: #{tpu_custom_call.1} parent=1 // pred_check
      _
    $region27: #{tpu_custom_call.1} parent=1 // pred_check_branch
      %332 = sbr.rel (0) target = $region29
    $region28: #{tpu_custom_call.1} parent=1 // pred_region
      %334 = vsyncadd [#allocation4], 0
      %s335 = sshll.u32 [#allocation8], 4
      %s336 = int_to_ptr.vmem [resolvable:$true] %s335
      %s337 = sshll.u32 %s3, 4
      %s338 = int_to_ptr.hbm [resolvable:$true] %s337
      %343 = dma.vmem_to_hbm [thread:$0]  %s336, 512, %s338, [#allocation4], 128, 128, 8
    $region29: #{tpu_custom_call.1} parent=1 // pred_fallthru
      _
    // Predicated region
    $region30: #{tpu_custom_call.1} parent=1 // pred_check
      _
    $region31: #{tpu_custom_call.1} parent=1 // pred_check_branch
      %345 = sbr.rel (0) target = $region33
    $region32: #{tpu_custom_call.1} parent=1 // pred_region
      %347 = vsyncadd [#allocation10], 0
      %s348 = sshll.u32 [#allocation9], 4
      %s349 = int_to_ptr.vmem [resolvable:$true] %s348
      %s350 = sshll.u32 %s4, 4
      %s351 = int_to_ptr.hbm [resolvable:$true] %s350
      %356 = dma.vmem_to_hbm [thread:$0]  %s349, 512, %s351, [#allocation10], 128, 128, 8
    $region33: #{tpu_custom_call.1} parent=1 // pred_fallthru
      _
    // Predicated region
    $region34: #{tpu_custom_call.1} parent=1 // pred_check
      _
    $region35: #{tpu_custom_call.1} parent=1 // pred_check_branch
      %358 = sbr.rel (0) target = $region37
    $region36: #{tpu_custom_call.1} parent=1 // pred_region
      %360 = dma.done [#allocation4], 512
    $region37: #{tpu_custom_call.1} parent=1 // pred_fallthru
      _
    // Predicated region
    $region38: #{tpu_custom_call.1} parent=1 // pred_check
      _
    $region39: #{tpu_custom_call.1} parent=1 // pred_check_branch
      %362 = sbr.rel (0) target = $region41
    $region40: #{tpu_custom_call.1} parent=1 // pred_region
      %364 = dma.done [#allocation10], 512
    $region41: #{tpu_custom_call.1} parent=1 // pred_fallthru
      _
    %365 = vsyncpa [#allocation3], 1
    %366 = vsyncpa [#allocation6], 1
    %367 = vsyncpa [#allocation4], 1
    %368 = vsyncpa [#allocation10], 1

</llo_original>
